<compile_context>
chip_gen: v6e
topology: v6e:2x2x1
jax: 0.10.0
libtpu: 0.0.40
codegen_flags: <defaults>
</compile_context>

<pallas_src>
import functools

import jax
import jax.numpy as jnp
from jax import lax
from jax.experimental import pallas as pl
from jax.experimental.pallas import tpu as pltpu

EPS = 1e-5  # nn.InstanceNorm2d default eps


# --------------------------------------------------------------------------- #
# Kernels
# --------------------------------------------------------------------------- #
def _adain_fused_kernel(x_ref, ss_ref, o_ref, *, inv_hw, n_pad):
    # x_ref:  (TC, HW_pad)  one channel-tile of one sample (native dtype)
    # ss_ref: (TC, 2)       [:,0]=style scale, [:,1]=style shift  (f32)
    # o_ref:  (TC, HW_pad)  output (native dtype)
    x = x_ref[...].astype(jnp.float32)

    mean = jnp.sum(x, axis=1, keepdims=True) * inv_hw          # (TC, 1)

    # Two-pass variance (block is resident, extra VPU work hides under DMA;
    # avoids E[x^2]-mean^2 cancellation).  Padded lanes are zero, so they each
    # contribute (0 - mean)^2 to the centered sum-of-squares; subtract exactly.
    centered = x - mean
    ssq = jnp.sum(centered * centered, axis=1, keepdims=True)  # (TC, 1)
    if n_pad:
        ssq = ssq - n_pad * (mean * mean)
    var = jnp.maximum(ssq * inv_hw, 0.0)

    scale = ss_ref[:, 0:1]
    shift = ss_ref[:, 1:2]
    a = scale * lax.rsqrt(var + EPS)                           # (TC, 1)
    b = shift - mean * a                                       # (TC, 1)

    o_ref[...] = (x * a + b).astype(o_ref.dtype)


def _adain_stats_kernel(x_ref, ss_ref, coef_ref, sum_ref, sq_ref, *, inv_hw):
    # Large-spatial path, phase 1: running sum / sumsq over HW tiles.
    # x_ref: (TC, THW), ss_ref: (TC, 2), coef_ref: (TC, 2) (a, b),
    # sum_ref/sq_ref: VMEM (TC, 1) f32 scratch.
    h = pl.program_id(2)

    @pl.when(h == 0)
    def _():
        sum_ref[...] = jnp.zeros_like(sum_ref)
        sq_ref[...] = jnp.zeros_like(sq_ref)

    x = x_ref[...].astype(jnp.float32)
    sum_ref[...] += jnp.sum(x, axis=1, keepdims=True)
    sq_ref[...] += jnp.sum(x * x, axis=1, keepdims=True)

    @pl.when(h == pl.num_programs(2) - 1)
    def _():
        # Padded lanes are zero -> contribute nothing to sum/sumsq.
        # TODO(synk): single-pass variance here can cancel for huge offsets;
        # acceptable for activations (f32 accumulation).
        mean = sum_ref[...] * inv_hw
        var = jnp.maximum(sq_ref[...] * inv_hw - mean * mean, 0.0)
        scale = ss_ref[:, 0:1]
        shift = ss_ref[:, 1:2]
        a = scale * lax.rsqrt(var + EPS)
        b = shift - mean * a
        coef_ref[...] = jnp.concatenate([a, b], axis=1)


def _adain_apply_kernel(x_ref, coef_ref, o_ref):
    # Large-spatial path, phase 2: o = x * a + b.
    x = x_ref[...].astype(jnp.float32)
    a = coef_ref[:, 0:1]
    b = coef_ref[:, 1:2]
    o_ref[...] = (x * a + b).astype(o_ref.dtype)


# --------------------------------------------------------------------------- #
# Tiling / budget helpers
# --------------------------------------------------------------------------- #
def _round_up(x, m):
    return ((x + m - 1) // m) * m


def _vmem_budget():
    """Returns (max single-block bytes, vmem_limit cap), generation-aware."""
    try:
        cap = pltpu.get_tpu_info().vmem_capacity_bytes
    except Exception:
        cap = 64 << 20  # conservative: assume v7x-class (64 MiB physical VMEM)
    if cap is None or cap <= (64 << 20):
        return 8 << 20, 48 << 20      # v7x-class
    return 16 << 20, 96 << 20         # v5e / v6e (128 MiB physical VMEM)


def _sublane_multiple(dtype):
    # f32 -> 8, bf16 -> 16, int8/fp8 -> 32 (sub-32-bit dtypes pack sublanes).
    return max(8, 32 // jnp.dtype(dtype).itemsize)


def _choose_channel_tile(N, C, HW_pad, itemsize, max_block_bytes, sub):
    """Pick a channel tile TC.  Returns (tc, fits_in_one_block)."""
    cands = [t for t in range(sub, C + 1, sub) if C % t == 0]
    if not cands:
        cands = [C]
    elif C not in cands:
        cands.append(C)
    # Megacore: keep >= 2 total grid steps when N == 1 (v7x has 2 TensorCores).
    if N == 1:
        multi = [t for t in cands if C // t >= 2]
        if multi:
            cands = multi
    fitting = [t for t in cands if t * HW_pad * itemsize <= max_block_bytes]
    if fitting:
        return max(fitting), True
    return min(cands), False


# --------------------------------------------------------------------------- #
# pallas_call wrappers
# --------------------------------------------------------------------------- #
def _adain_fused_call(x, ss, tc, HW, HW_pad, out_dtype, vmem_cap_limit):
    N, C, _ = x.shape
    itemsize = jnp.dtype(out_dtype).itemsize
    block_bytes = tc * HW_pad * itemsize
    vmem_limit = int(min(max(4 * block_bytes + (6 << 20), 32 << 20),
                         vmem_cap_limit))

    kernel = functools.partial(_adain_fused_kernel,
                               inv_hw=1.0 / HW, n_pad=HW_pad - HW)

    cost = pl.CostEstimate(
        flops=int(7 * N * C * HW),
        transcendentals=int(N * C),
        bytes_accessed=int(2 * N * C * HW_pad * itemsize),
    )

    # NOTE: if a DMA gap shows in traces on v7x, consider
    # pipeline_mode=pl.Buffered(3) on the image in_spec (VMEM budget permits).
    return pl.pallas_call(
        kernel,
        out_shape=jax.ShapeDtypeStruct((N, C, HW_pad), out_dtype),
        grid_spec=pltpu.PrefetchScalarGridSpec(
            num_scalar_prefetch=0,
            grid=(N, C // tc),
            in_specs=[
                pl.BlockSpec((None, tc, HW_pad), lambda n, c: (n, c, 0)),
                pl.BlockSpec((None, tc, 2), lambda n, c: (n, c, 0)),
            ],
            out_specs=pl.BlockSpec((None, tc, HW_pad), lambda n, c: (n, c, 0)),
        ),
        compiler_params=pltpu.CompilerParams(
            dimension_semantics=("parallel", "parallel"),
            vmem_limit_bytes=vmem_limit,
        ),
        cost_estimate=cost,
    )(x, ss)


def _adain_tiled_call(x, ss, tc, thw, HW, HW_pad, out_dtype, vmem_cap_limit):
    N, C, _ = x.shape
    itemsize = jnp.dtype(out_dtype).itemsize
    n_hw = HW_pad // thw
    block_bytes = tc * thw * itemsize
    vmem_limit = int(min(max(4 * block_bytes + (6 << 20), 32 << 20),
                         vmem_cap_limit))

    # Phase 1: per-(sample, channel) statistics -> affine coefficients (a, b).
    stats_kernel = functools.partial(_adain_stats_kernel, inv_hw=1.0 / HW)
    coef = pl.pallas_call(
        stats_kernel,
        out_shape=jax.ShapeDtypeStruct((N, C, 2), jnp.float32),
        grid_spec=pltpu.PrefetchScalarGridSpec(
            num_scalar_prefetch=0,
            grid=(N, C // tc, n_hw),
            in_specs=[
                pl.BlockSpec((None, tc, thw), lambda n, c, h: (n, c, h)),
                pl.BlockSpec((None, tc, 2), lambda n, c, h: (n, c, 0)),
            ],
            out_specs=pl.BlockSpec((None, tc, 2), lambda n, c, h: (n, c, 0)),
            scratch_shapes=[pltpu.VMEM((tc, 1), jnp.float32),
                            pltpu.VMEM((tc, 1), jnp.float32)],
        ),
        compiler_params=pltpu.CompilerParams(
            dimension_semantics=("parallel", "parallel", "arbitrary"),
            vmem_limit_bytes=vmem_limit,
        ),
        cost_estimate=pl.CostEstimate(
            flops=int(3 * N * C * HW),
            transcendentals=int(N * C),
            bytes_accessed=int(N * C * HW_pad * itemsize),
        ),
    )(x, ss)

    # Phase 2: apply o = x * a + b.
    out = pl.pallas_call(
        _adain_apply_kernel,
        out_shape=jax.ShapeDtypeStruct((N, C, HW_pad), out_dtype),
        grid_spec=pltpu.PrefetchScalarGridSpec(
            num_scalar_prefetch=0,
            grid=(N, C // tc, n_hw),
            in_specs=[
                pl.BlockSpec((None, tc, thw), lambda n, c, h: (n, c, h)),
                pl.BlockSpec((None, tc, 2), lambda n, c, h: (n, c, 0)),
            ],
            out_specs=pl.BlockSpec((None, tc, thw), lambda n, c, h: (n, c, h)),
        ),
        compiler_params=pltpu.CompilerParams(
            dimension_semantics=("parallel", "parallel", "parallel"),
            vmem_limit_bytes=vmem_limit,
        ),
        cost_estimate=pl.CostEstimate(
            flops=int(2 * N * C * HW),
            transcendentals=0,
            bytes_accessed=int(2 * N * C * HW_pad * itemsize),
        ),
    )(x, coef)
    return out


# --------------------------------------------------------------------------- #
# Public forward
# --------------------------------------------------------------------------- #
def adain_forward(image, w, w_scale, b_scale, w_shift, b_shift,
                  _force_max_block_bytes=None):
    """image: (N, C, H, W) in f32 or bf16; w: (N, w_dim)."""
    N, C, H, Wd = image.shape
    HW = H * Wd
    out_dtype = image.dtype
    itemsize = jnp.dtype(out_dtype).itemsize

    # Style transform: ONE fused GEMM for both scale and shift (MXU-friendly,
    # hoisted out of the bandwidth-bound kernel), stacked to (N, C, 2) f32.
    W_style = jnp.concatenate([w_scale, w_shift], axis=0).astype(jnp.float32)
    b_style = jnp.concatenate([b_scale, b_shift], axis=0).astype(jnp.float32)
    ss_flat = w.astype(jnp.float32) @ W_style.T + b_style           # (N, 2C)
    ss = jnp.stack([ss_flat[:, :C], ss_flat[:, C:]], axis=-1)       # (N, C, 2)

    max_block_bytes, vmem_cap_limit = _vmem_budget()
    if _force_max_block_bytes is not None:
        max_block_bytes = _force_max_block_bytes

    HW128 = _round_up(HW, 128)                 # lane-dense spatial extent
    sub = _sublane_multiple(out_dtype)
    x = image.reshape(N, C, HW)                # native dtype, no f32 upcast

    tc, fits = _choose_channel_tile(N, C, HW128, itemsize, max_block_bytes, sub)

    if fits:
        HW_pad = HW128
        if HW_pad != HW:
            x = jnp.pad(x, ((0, 0), (0, 0), (0, HW_pad - HW)))
        out = _adain_fused_call(x, ss, tc, HW, HW_pad, out_dtype, vmem_cap_limit)
    else:
        # Spatial-tiled two-phase path for very large H*W.
        thw = max((max_block_bytes // (tc * itemsize)) // 128 * 128, 128)
        thw = min(thw, HW128)
        HW_pad = _round_up(HW, thw)
        if HW_pad != HW:
            x = jnp.pad(x, ((0, 0), (0, 0), (0, HW_pad - HW)))
        out = _adain_tiled_call(x, ss, tc, thw, HW, HW_pad, out_dtype,
                                vmem_cap_limit)

    if HW_pad != HW:
        out = out[:, :, :HW]
    return out.reshape(N, C, H, Wd)


# --------------------------------------------------------------------------- #
# Params / reference
# --------------------------------------------------------------------------- #
def init_params(key, channels, w_dim):
    # Deterministic init mimicking nn.Linear default (uniform +/- 1/sqrt(fan_in)).
    k1, k2, k3, k4 = jax.random.split(key, 4)
    bound = 1.0 / jnp.sqrt(jnp.float32(w_dim))
    w_scale = jax.random.uniform(k1, (channels, w_dim), jnp.float32, -bound, bound)
    b_scale = jax.random.uniform(k2, (channels,), jnp.float32, -bound, bound)
    w_shift = jax.random.uniform(k3, (channels, w_dim), jnp.float32, -bound, bound)
    b_shift = jax.random.uniform(k4, (channels,), jnp.float32, -bound, bound)
    return w_scale, b_scale, w_shift, b_shift


def adain_reference(image, w, w_scale, b_scale, w_shift, b_shift):
    # Pure-JAX reference (matches torch InstanceNorm2d + style affine).
    image = image.astype(jnp.float32)
    mean = jnp.mean(image, axis=(2, 3), keepdims=True)
    var = jnp.mean((image - mean) ** 2, axis=(2, 3), keepdims=True)
    norm = (image - mean) / jnp.sqrt(var + EPS)
    scale = (w @ w_scale.T + b_scale)[:, :, None, None]
    shift = (w @ w_shift.T + b_shift)[:, :, None, None]
    return scale * norm + shift


if __name__ == "__main__":
    N, C, H, W = 2, 4, 16, 16
    W_DIM = 32

    key = jax.random.PRNGKey(0)
    k_img, k_w, k_params = jax.random.split(key, 3)
    image = jax.random.normal(k_img, (N, C, H, W), jnp.float32)
    w_vec = jax.random.normal(k_w, (N, W_DIM), jnp.float32)
    w_scale, b_scale, w_shift, b_shift = init_params(k_params, C, W_DIM)

    ref = adain_reference(image, w_vec, w_scale, b_scale, w_shift, b_shift)

    # Path A: resident-block fused kernel (common case).
    out = adain_forward(image, w_vec, w_scale, b_scale, w_shift, b_shift)
    out = jax.block_until_ready(out)
    assert out.shape == (N, C, H, W)
    assert jnp.allclose(out, ref, atol=1e-4, rtol=1e-4)

    # Path B: spatial-tiled fallback, forced via a tiny block budget so the
    # large-H*W code path is exercised and verified on small inputs.
    out_big = adain_forward(image, w_vec, w_scale, b_scale, w_shift, b_shift,
                            _force_max_block_bytes=2048)
    out_big = jax.block_until_ready(out_big)
    assert jnp.allclose(out_big, ref, atol=1e-4, rtol=1e-4)

    # Path C: native bf16 I/O (halved HBM traffic); compare vs a reference on
    # the bf16-rounded input.
    image_bf16 = image.astype(jnp.bfloat16)
    ref_bf16 = adain_reference(image_bf16.astype(jnp.float32), w_vec,
                               w_scale, b_scale, w_shift, b_shift)
    out_bf16 = adain_forward(image_bf16, w_vec, w_scale, b_scale,
                             w_shift, b_shift)
    out_bf16 = jax.block_until_ready(out_bf16)
    assert out_bf16.dtype == jnp.bfloat16
    assert jnp.allclose(out_bf16.astype(jnp.float32), ref_bf16,
                        atol=3e-2, rtol=3e-2)

    print("KERNEL_OK")
</pallas_src>

<mosaic_0001>
module attributes {stable_mosaic.version = 11 : i64} {
  func.func @_adain_fused_kernel(%arg0: i32, %arg1: i32, %arg2: memref<1x4x256xf32, #tpu.memory_space<vmem>>, %arg3: memref<1x4x2xf32, #tpu.memory_space<vmem>>, %arg4: memref<1x4x256xf32, #tpu.memory_space<vmem>>) attributes {dimension_semantics = [#tpu.dimension_semantics<parallel>, #tpu.dimension_semantics<parallel>], iteration_bounds = array<i64: 2, 1>, scalar_prefetch = 0 : i64, scratch_operands = 0 : i64, tpu.core_type = #tpu.core_type<tc>, window_params = [{transform_indices = @transform_0, window_bounds = array<i64: 1, 4, 256>}, {transform_indices = @transform_1, window_bounds = array<i64: 1, 4, 2>}, {transform_indices = @transform_2, window_bounds = array<i64: 1, 4, 256>}]} {
    %c0 = arith.constant 0 : index
    %c0_0 = arith.constant 0 : index
    %c0_1 = arith.constant 0 : index
    %0 = vector.load %arg2[%c0, %c0_0, %c0_1] : memref<1x4x256xf32, #tpu.memory_space<vmem>>, vector<1x4x256xf32>
    %1 = vector.shape_cast %0 : vector<1x4x256xf32> to vector<4x256xf32>
    %cst = arith.constant dense<0.000000e+00> : vector<4xf32>
    %2 = vector.multi_reduction <add>, %1, %cst [1] : vector<4x256xf32> to vector<4xf32>
    %3 = vector.shape_cast %2 : vector<4xf32> to vector<4x1xf32>
    %cst_2 = arith.constant 3.906250e-03 : f32
    %4 = vector.broadcast %cst_2 : f32 to vector<4x1xf32>
    %5 = arith.mulf %3, %4 : vector<4x1xf32>
    %6 = vector.broadcast %5 : vector<4x1xf32> to vector<4x256xf32>
    %7 = arith.subf %1, %6 : vector<4x256xf32>
    %8 = arith.mulf %7, %7 : vector<4x256xf32>
    %cst_3 = arith.constant dense<0.000000e+00> : vector<4xf32>
    %9 = vector.multi_reduction <add>, %8, %cst_3 [1] : vector<4x256xf32> to vector<4xf32>
    %10 = vector.shape_cast %9 : vector<4xf32> to vector<4x1xf32>
    %cst_4 = arith.constant 3.906250e-03 : f32
    %11 = vector.broadcast %cst_4 : f32 to vector<4x1xf32>
    %12 = arith.mulf %10, %11 : vector<4x1xf32>
    %cst_5 = arith.constant 0.000000e+00 : f32
    %13 = vector.broadcast %cst_5 : f32 to vector<4x1xf32>
    %14 = arith.maximumf %12, %13 : vector<4x1xf32>
    %c0_6 = arith.constant 0 : index
    %c0_7 = arith.constant 0 : index
    %c0_8 = arith.constant 0 : index
    %15 = vector.load %arg3[%c0_6, %c0_7, %c0_8] : memref<1x4x2xf32, #tpu.memory_space<vmem>>, vector<1x4x1xf32>
    %16 = vector.shape_cast %15 : vector<1x4x1xf32> to vector<4x1xf32>
    %c0_9 = arith.constant 0 : index
    %c0_10 = arith.constant 0 : index
    %c1 = arith.constant 1 : index
    %17 = vector.load %arg3[%c0_9, %c0_10, %c1] : memref<1x4x2xf32, #tpu.memory_space<vmem>>, vector<1x4x1xf32>
    %18 = vector.shape_cast %17 : vector<1x4x1xf32> to vector<4x1xf32>
    %cst_11 = arith.constant 9.99999974E-6 : f32
    %19 = vector.broadcast %cst_11 : f32 to vector<4x1xf32>
    %20 = arith.addf %14, %19 : vector<4x1xf32>
    %21 = math.rsqrt %20 : vector<4x1xf32>
    %22 = arith.mulf %16, %21 : vector<4x1xf32>
    %23 = arith.mulf %5, %22 : vector<4x1xf32>
    %24 = arith.subf %18, %23 : vector<4x1xf32>
    %25 = vector.broadcast %22 : vector<4x1xf32> to vector<4x256xf32>
    %26 = arith.mulf %1, %25 : vector<4x256xf32>
    %27 = vector.broadcast %24 : vector<4x1xf32> to vector<4x256xf32>
    %28 = arith.addf %26, %27 : vector<4x256xf32>
    %c0_12 = arith.constant 0 : index
    %c0_13 = arith.constant 0 : index
    %c0_14 = arith.constant 0 : index
    %29 = vector.load %arg4[%c0_12, %c0_13, %c0_14] : memref<1x4x256xf32, #tpu.memory_space<vmem>>, vector<1x4x256xf32>
    %30 = vector.shape_cast %29 : vector<1x4x256xf32> to vector<4x256xf32>
    %31 = vector.shape_cast %28 : vector<4x256xf32> to vector<1x4x256xf32>
    tpu.vector_store %arg4[%c0_12, %c0_13, %c0_14], %31 {strides = array<i32>} : memref<1x4x256xf32, #tpu.memory_space<vmem>>, vector<1x4x256xf32>,
    return
  }
  func.func @transform_0(%arg0: i32, %arg1: i32) -> (i32, i32, i32) {
    %c0_i32 = arith.constant 0 : i32
    %c0_i32_0 = arith.constant 0 : i32
    return %arg0, %arg1, %c0_i32 : i32, i32, i32
  }
  func.func @transform_1(%arg0: i32, %arg1: i32) -> (i32, i32, i32) {
    %c0_i32 = arith.constant 0 : i32
    %c0_i32_0 = arith.constant 0 : i32
    return %arg0, %arg1, %c0_i32 : i32, i32, i32
  }
  func.func @transform_2(%arg0: i32, %arg1: i32) -> (i32, i32, i32) {
    %c0_i32 = arith.constant 0 : i32
    %c0_i32_0 = arith.constant 0 : i32
    return %arg0, %arg1, %c0_i32 : i32, i32, i32
  }
}

</mosaic_0001>

<llo_original>
// kernel: tpu_custom_call.1
$region0: #{tpu_custom_call.1}
  #allocation0 [shape = 'u32[]', space=smem, size = 0x4, offset = 0x4, fixed_abs, tag = 'smem constant byte address 0x4 - core index']
  #allocation1 [shape = 'u32[144,128]{1,0:T(1,128)}', space=vmem, size = 0x12000, scoped, tag = 'internal scratch']
  %s0 = inlined_call_operand.hbm [shape: f32[2,4,256], index: 0, kind: input, shape index: {}]
  %s1 = inlined_call_operand.vmem [shape: f32[2,4,2], index: 1, kind: input, shape index: {}]
  %s2 = inlined_call_operand.hbm [shape: f32[2,4,256], index: 2, kind: output, shape index: {}]
  %s3 = sld [smem:[#allocation0]]
  $region45: #{tpu_custom_call.1} parent=0
    _
  %s5 = ssub.s32 1, %s3
  %s6 = scalar_select 0, %s5, %s3
  $region1: #{tpu_custom_call.1} parent=0
    #allocation2 [shape = 'u8[8192]{0}', space=vmem, size = 0x2000, scoped, tag = 'input window, operand 0']
    #allocation3 [shape = 's32[2]{0}', space=sflag, size = 0x8, scoped, tag = 'scoped memory for tpu_custom_call.1']
    #allocation4 [shape = 's32[2]{0}', space=sflag, size = 0x8, scoped, tag = 'scoped memory for tpu_custom_call.1']
    #allocation5 [shape = 'u8[8192]{0}', space=vmem, size = 0x2000, scoped, tag = 'output window, operand 0']
    %7 = vsyncpa [#allocation3], 0
    %s8 = scalar_lea.sflag [#allocation3], 1
    %9 = vsyncpa %s8, 0
    %10 = vsyncpa [#allocation4], 0
    %s11 = scalar_lea.sflag [#allocation4], 1
    %12 = vsyncpa %s11, 0
    loop: start=0, step=1, limit=4
    $region2: #{tpu_custom_call.1} parent=1 // loop_pre_header
      _
    $region3: #{tpu_custom_call.1} parent=1 // loop_header
      %s14 = sphi 0, %s18
      %p15 = scmp.ge.s32.totalorder %s14, 4
      %s21 = sphi 0, %s33
      %s22 = sphi 0, %s29
      %s23 = sphi 0, %s21
      %s24 = sphi 0, %s22
      %s25 = sphi 0, %s23
      %s26 = sphi 0, %s24
      %s38 = sphi 0, %s40
      %s41 = sphi 0, %s38
      %s42 = sphi 0, %s41
      %s58 = sphi 0, %s42
      %s66 = sphi 0, %s68
      %s69 = sphi 0, %s66
      %s70 = sphi 0, %s69
      %s86 = sphi 0, %s70
      %s94 = sphi 0, %s96
      %s97 = sphi 0, %s94
      %s98 = sphi 0, %s97
      %s114 = sphi 0, %s98
    $region4: #{tpu_custom_call.1} parent=1 // loop_header_branch
      %17 = sbr.rel (%p15) target = $region8
    $region5: #{tpu_custom_call.1} parent=1 // loop_body
      %s19 = ssub.s32 %s14, 1
      %s20 = ssub.s32 %s14, 2
      %s27 = sadd.s32 1, %s22
      %p28 = scmp.ge.s32.totalorder %s27, 1
      %s29 = scalar_select %p28, 0, %s27
      %s30 = sadd.s32 1, %s21
      %s31 = scalar_select %p28, %s30, %s21
      %p32 = scmp.ge.s32.totalorder %s31, 2
      %s33 = scalar_select %p32, 0, %s31
      %s34 = ssub.s32 %s21, %s33
      %s35 = ssub.s32 %s22, %s29
      %s36 = sor.u32 %s34, %s35
      %p37 = scmp.eq.s32.totalorder %s36, 0
      %s39 = sadd.s32 %s38, 1
      %s40 = scalar_select %p37, %s38, %s39
      %p43 = pneg %p37
      %p44 = scmp.eq.s32.totalorder %s14, 1
      %p45 = por %p43, %p44
      %p46 = scmp.ne.s32.totalorder %s38, %s41
      %p47 = scmp.eq.s32.totalorder %s14, 0
      %p48 = por %p46, %p47
      %p49 = scmp.ne.s32.totalorder %s38, %s41
      %p50 = scmp.eq.s32.totalorder %s19, 1
      %p51 = por %p49, %p50
      %p52 = scmp.ne.s32.totalorder %s41, %s42
      %p53 = scmp.eq.s32.totalorder %s19, 0
      %p54 = por %p52, %p53
      %p55 = scmp.ne.s32.totalorder %s41, %s42
      %p56 = scmp.eq.s32.totalorder %s20, 1
      %p57 = por %p55, %p56
      %p59 = scmp.ne.s32.totalorder %s42, %s58
      %p60 = scmp.eq.s32.totalorder %s20, 0
      %p61 = por %p59, %p60
      %s62 = ssub.s32 %s21, %s33
      %s63 = ssub.s32 %s22, %s29
      %s64 = sor.u32 %s62, %s63
      %p65 = scmp.eq.s32.totalorder %s64, 0
      %s67 = sadd.s32 %s66, 1
      %s68 = scalar_select %p65, %s66, %s67
      %p71 = pneg %p65
      %p72 = scmp.eq.s32.totalorder %s14, 1
      %p73 = por %p71, %p72
      %p74 = scmp.ne.s32.totalorder %s66, %s69
      %p75 = scmp.eq.s32.totalorder %s14, 0
      %p76 = por %p74, %p75
      %p77 = scmp.ne.s32.totalorder %s66, %s69
      %p78 = scmp.eq.s32.totalorder %s19, 1
      %p79 = por %p77, %p78
      %p80 = scmp.ne.s32.totalorder %s69, %s70
      %p81 = scmp.eq.s32.totalorder %s19, 0
      %p82 = por %p80, %p81
      %p83 = scmp.ne.s32.totalorder %s69, %s70
      %p84 = scmp.eq.s32.totalorder %s20, 1
      %p85 = por %p83, %p84
      %p87 = scmp.ne.s32.totalorder %s70, %s86
      %p88 = scmp.eq.s32.totalorder %s20, 0
      %p89 = por %p87, %p88
      %s90 = ssub.s32 %s21, %s33
      %s91 = ssub.s32 %s22, %s29
      %s92 = sor.u32 %s90, %s91
      %p93 = scmp.eq.s32.totalorder %s92, 0
      %s95 = sadd.s32 %s94, 1
      %s96 = scalar_select %p93, %s94, %s95
      %p99 = pneg %p93
      %p100 = scmp.eq.s32.totalorder %s14, 1
      %p101 = por %p99, %p100
      %p102 = scmp.ne.s32.totalorder %s94, %s97
      %p103 = scmp.eq.s32.totalorder %s14, 0
      %p104 = por %p102, %p103
      %p105 = scmp.ne.s32.totalorder %s94, %s97
      %p106 = scmp.eq.s32.totalorder %s19, 1
      %p107 = por %p105, %p106
      %p108 = scmp.ne.s32.totalorder %s97, %s98
      %p109 = scmp.eq.s32.totalorder %s19, 0
      %p110 = por %p108, %p109
      %p111 = scmp.ne.s32.totalorder %s97, %s98
      %p112 = scmp.eq.s32.totalorder %s20, 1
      %p113 = por %p111, %p112
      %p115 = scmp.ne.s32.totalorder %s98, %s114
      %p116 = scmp.eq.s32.totalorder %s20, 0
      %p117 = por %p115, %p116
      %p118 = scmp.le.s32.totalorder 1, %s14
      %p119 = scmp.lt.s32.totalorder %s14, 3
      %p120 = pnand %p118, %p119
      %p121 = pneg %p120
      // Predicated region
      $region9: #{tpu_custom_call.1} parent=5 // pred_check
        _
      $region10: #{tpu_custom_call.1} parent=5 // pred_check_branch
        %123 = sbr.rel (%p120) target = $region12
      $region11: #{tpu_custom_call.1} parent=5 // pred_region
        %s124 = ssub.s32 %s14, 1
      $region12: #{tpu_custom_call.1} parent=5 // pred_fallthru
        _
      %p125 = scmp.lt.s32.totalorder %s14, 2
      // Predicated region
      $region13: #{tpu_custom_call.1} parent=5 // pred_check
        %p126 = pneg %p125
      $region14: #{tpu_custom_call.1} parent=5 // pred_check_branch
        %128 = sbr.rel (%p126) target = $region16
      $region15: #{tpu_custom_call.1} parent=5 // pred_region
        // Predicated region
        $region17: #{tpu_custom_call.1} parent=15 // pred_check
          %p129 = pneg %p48
        $region18: #{tpu_custom_call.1} parent=15 // pred_check_branch
          %131 = sbr.rel (%p129) target = $region20
        $region19: #{tpu_custom_call.1} parent=15 // pred_region
          %s132 = sand.u32 %s38, 1
          %s133 = scalar_lea.sflag [#allocation3], %s132
          %s134 = sand.u32 %s38, 1
          %s135 = smul.addr %s134, 8
          %s136 = scalar_lea.vmem [#allocation2], %s135
          %s138 = ssub.s32 128, 128
          %139 = vsyncadd %s133, %s138
          %s140 = smul.addr %s22, 2
          %s141 = smul.addr %s21, 2
          %s142 = sadd.s32 %s140, %s141
          %s143 = smul.addr %s142, 64
          %s144 = scalar_lea.hbm %s0, %s143
          %s146 = sshll.u32 %s136, 4
          %s147 = int_to_ptr.vmem [resolvable:$true] %s146
          %149 = dma.hbm_to_vmem [thread:$0]  %s144, 128, %s147, %s133
        $region20: #{tpu_custom_call.1} parent=15 // pred_fallthru
          _
        // Predicated region
        $region21: #{tpu_custom_call.1} parent=15 // pred_check
          %p150 = pneg %p76
        $region22: #{tpu_custom_call.1} parent=15 // pred_check_branch
          %152 = sbr.rel (%p150) target = $region24
        $region23: #{tpu_custom_call.1} parent=15 // pred_region
          %p153 = scmp.lt.s32.totalorder %s21, 1
          %s154 = scalar_select %p153, %s21, 1
          %p155 = scmp.lt.s32.totalorder %s22, 0
          %s156 = scalar_select %p155, %s22, 0
          %s157 = sadd.s32 %s156, %s154
          %s158 = smul.addr %s157, 4
          %s159 = scalar_lea.vmem %s1, %s158
        $region24: #{tpu_custom_call.1} parent=15 // pred_fallthru
          _
      $region16: #{tpu_custom_call.1} parent=5 // pred_fallthru
        _
      %p160 = scmp.le.s32.totalorder 1, %s14
      %p161 = scmp.lt.s32.totalorder %s14, 3
      %p162 = pnand %p160, %p161
      %p163 = pneg %p162
      // Predicated region
      $region25: #{tpu_custom_call.1} parent=5 // pred_check
        _
      $region26: #{tpu_custom_call.1} parent=5 // pred_check_branch
        %165 = sbr.rel (%p162) target = $region28
      $region27: #{tpu_custom_call.1} parent=5 // pred_region
        %s166 = ssub.s32 %s14, 1
        %s167 = sand.u32 %s41, 1
        %s168 = scalar_lea.sflag [#allocation3], %s167
        %s169 = sand.u32 %s41, 1
        %s170 = smul.addr %s169, 8
        %s171 = scalar_lea.vmem [#allocation2], %s170
        // Predicated region
        $region29: #{tpu_custom_call.1} parent=27 // pred_check
          %p172 = pneg %p54
        $region30: #{tpu_custom_call.1} parent=27 // pred_check_branch
          %174 = sbr.rel (%p172) target = $region32
        $region31: #{tpu_custom_call.1} parent=27 // pred_region
          %175 = dma.done %s168, 128
        $region32: #{tpu_custom_call.1} parent=27 // pred_fallthru
          _
        %s176 = sand.u32 %s41, 1
        %s177 = scalar_lea.sflag [#allocation3], %s176
        %s178 = sand.u32 %s41, 1
        %s179 = smul.addr %s178, 8
        %s180 = scalar_lea.vmem [#allocation2], %s179
        %p181 = pneg %p54
        %p182 = pneg %p51
        %p183 = scmp.lt.s32.totalorder %s23, 1
        %s184 = scalar_select %p183, %s23, 1
        %p185 = scmp.lt.s32.totalorder %s24, 0
        %s186 = scalar_select %p185, %s24, 0
        %s187 = sadd.s32 %s186, %s184
        %s188 = smul.addr %s187, 4
        %s189 = scalar_lea.vmem %s1, %s188
        %p190 = pneg %p82
        %p191 = pneg %p79
        %p192 = pneg %p110
        %p193 = pneg %p107
        %s194 = sand.u32 %s97, 1
        %s195 = scalar_lea.sflag [#allocation4], %s194
        %s196 = sand.u32 %s97, 1
        %s197 = smul.addr %s196, 8
        %s198 = scalar_lea.vmem [#allocation5], %s197
        %p199 = scmp.lt.s32.totalorder %s23, 1
        %s200 = scalar_select %p199, %s23, 1
        %p201 = scmp.lt.s32.totalorder %s24, 0
        %s202 = scalar_select %p201, %s24, 0
        %s203 = sadd.s32 %s202, %s200
        %s204 = smul.addr %s203, 4
        %s205 = scalar_lea.vmem %s1, %s204
        %v206 = vld [vmem:[%s171] sm:$0xff]
        %v208 = vcombine.high %v206, %v206
        %vm210 = vcmask 1043456
        %v211 = vsel %vm210, %v206, 0.0
        %v212 = vsel %vm210, %v208, 0.0
        %v213 = vadd.f32 %v211, %v212
        %214 = vadd.xlane.f32.xlu0 %v213
        %v215 = vpop.xlane.xlu0 %214
        %v216 = vmul.f32 %v215, 0.00390625
        %v219 = vunpack.c.l.s4 839922192
        %v220 = vunpack.c.0.s8 %v219
        %v221 = vlaneseq
        %v222 = vshrl.u32 %v221, 7
        %v223 = vsub.s32 %v220, %v222
        %v224 = vrot.slane %v216, %v223
        %v226 = vsub.f32 %v206, %v224
        %v227 = vmul.f32 %v226, %v226
        %v229 = vcombine.high %v227, %v227
        %v231 = vsel %vm210, %v227, 0.0
        %v232 = vsel %vm210, %v229, 0.0
        %v233 = vadd.f32 %v231, %v232
        %234 = vadd.xlane.f32.xlu0 %v233
        %v235 = vpop.xlane.xlu0 %234
        %v236 = vmul.f32 %v235, 0.00390625
        %v237 = vmax.f32 %v236, 0.0
        %v238 = vld [vmem:[%s205] sm:$0xf]
        %v239 = vadd.f32 %v237, 1e-05
        %v240 = vrsqrt.pop %v239
        %v241 = vmul.f32 %v238, %v240
        %v242 = vmul.f32 %v216, %v241
        %244 = vrot.lane.b32.xlu0 %v242, 1
        %v245 = vpop.permute.xlu0 %244
        %v247 = vsub.f32 %v238, %v245
        %249 = vset.pattern.permute.xlu0 0
        %250 = vperm.xlu0 %249, %v241
        %v251 = vpop.permute.xlu0 %250
        %v253 = vunpack.c.l.s4 839922192
        %v254 = vunpack.c.0.s8 %v253
        %v255 = vlaneseq
        %v256 = vshrl.u32 %v255, 7
        %v257 = vsub.s32 %v254, %v256
        %v258 = vrot.slane %v251, %v257
        %v260 = vmul.f32 %v206, %v258
        %262 = vset.pattern.permute.xlu0 1
        %263 = vperm.xlu0 %262, %v247
        %v264 = vpop.permute.xlu0 %263
        %v266 = vunpack.c.l.s4 839922192
        %v267 = vunpack.c.0.s8 %v266
        %v268 = vlaneseq
        %v269 = vshrl.u32 %v268, 7
        %v270 = vsub.s32 %v267, %v269
        %v271 = vrot.slane %v264, %v270
        %v273 = vadd.f32 %v260, %v271
        %274 = vst [vmem:[%s198] sm:$0xff] %v273
        %s275 = sand.u32 %s97, 1
        %s276 = scalar_lea.sflag [#allocation4], %s275
        %s277 = sand.u32 %s97, 1
        %s278 = smul.addr %s277, 8
        %s279 = scalar_lea.vmem [#allocation5], %s278
        // Predicated region
        $region33: #{tpu_custom_call.1} parent=27 // pred_check
          %p280 = pneg %p107
        $region34: #{tpu_custom_call.1} parent=27 // pred_check_branch
          %282 = sbr.rel (%p280) target = $region36
        $region35: #{tpu_custom_call.1} parent=27 // pred_region
          %s284 = ssub.s32 128, 128
          %285 = vsyncadd %s276, %s284
          %s286 = smul.addr %s24, 2
          %s287 = smul.addr %s23, 2
          %s288 = sadd.s32 %s286, %s287
          %s289 = smul.addr %s288, 64
          %s290 = scalar_lea.hbm %s2, %s289
          %s292 = sshll.u32 %s279, 4
          %s293 = int_to_ptr.vmem [resolvable:$true] %s292
          %295 = dma.vmem_to_hbm [thread:$0]  %s293, 128, %s290, %s276
        $region36: #{tpu_custom_call.1} parent=27 // pred_fallthru
          _
      $region28: #{tpu_custom_call.1} parent=5 // pred_fallthru
        _
      %p296 = scmp.le.s32.totalorder 2, %s14
      // Predicated region
      $region37: #{tpu_custom_call.1} parent=5 // pred_check
        %p297 = pneg %p296
      $region38: #{tpu_custom_call.1} parent=5 // pred_check_branch
        %299 = sbr.rel (%p297) target = $region40
      $region39: #{tpu_custom_call.1} parent=5 // pred_region
        %s300 = ssub.s32 %s14, 2
        // Predicated region
        $region41: #{tpu_custom_call.1} parent=39 // pred_check
          %p301 = pneg %p113
        $region42: #{tpu_custom_call.1} parent=39 // pred_check_branch
          %303 = sbr.rel (%p301) target = $region44
        $region43: #{tpu_custom_call.1} parent=39 // pred_region
          %s304 = sand.u32 %s98, 1
          %s305 = scalar_lea.sflag [#allocation4], %s304
          %s306 = sand.u32 %s98, 1
          %s307 = smul.addr %s306, 8
          %s308 = scalar_lea.vmem [#allocation5], %s307
          %309 = dma.done %s305, 128
        $region44: #{tpu_custom_call.1} parent=39 // pred_fallthru
          _
      $region40: #{tpu_custom_call.1} parent=5 // pred_fallthru
        _
    $region6: #{tpu_custom_call.1} parent=1 // loop_footer
      %s18 = sadd.s32 1, %s14
    $region7: #{tpu_custom_call.1} parent=1 // loop_footer_branch
      %13 = sbr.rel target = $region3
    $region8: #{tpu_custom_call.1} parent=1 // loop_exit
      _
    %310 = vsyncpa [#allocation3], 1
    %s311 = scalar_lea.sflag [#allocation3], 1
    %312 = vsyncpa %s311, 1
    %313 = vsyncpa [#allocation4], 1
    %s314 = scalar_lea.sflag [#allocation4], 1
    %315 = vsyncpa %s314, 1

</llo_original>
